<compile_context>
chip_gen: v6e
topology: v6e:2x2x1
jax: 0.10.0
libtpu: 0.0.40
codegen_flags: <defaults>
</compile_context>

<pallas_src>
import jax
import jax.numpy as jnp
import numpy as np
from jax.experimental import pallas as pl
from jax.experimental.pallas import tpu as pltpu

# BERT special-token ids (bert-base-uncased)
CLS_ID = 101
SEP_ID = 102
PAD_ID = 0

MAX_LENGTH = 77                 # matches BERTTokenizer(max_length=77)
LANE_W = 128                    # lane-padded working width (>= MAX_LENGTH)
MAX_ROW_TILE = 512              # rows per grid step (multiple of 8)


def _pack_kernel(len_ref, ids_ref, out_ref):
    """Builds padded BERT input_ids rows.

    len_ref : [TB, 1]      int32  clamped content length per row (<= 75)
    ids_ref : [TB, LANE_W] int32  lane 0 = CLS_ID, lanes 1..C = raw ids,
                                  rest = PAD_ID (prepared host-side)
    out_ref : [TB, LANE_W] int32  packed row: [CLS] ids[:L] [SEP] PAD...
    """
    TB, W = out_ref.shape
    pos = jax.lax.broadcasted_iota(jnp.int32, (TB, W), 1)
    # single lane-broadcast of the per-row length, reused by both compares
    L = jnp.broadcast_to(len_ref[...], (TB, W))

    packed = jnp.where(
        pos <= L,                       # lanes 0..L : CLS + content (pre-baked)
        ids_ref[...],
        jnp.where(pos == L + 1,         # lane L+1   : SEP
                  jnp.int32(SEP_ID),
                  jnp.int32(PAD_ID)),   # rest       : PAD
    )
    out_ref[...] = packed


def bert_tokenizer_forward(raw_ids, lengths):
    """Pallas equivalent of BERTTokenizer.forward on pre-tokenized ids.

    raw_ids : [B, N] int32  wordpiece ids produced by (host-side) WordPiece
    lengths : [B]    int32  valid length of each row of raw_ids
    returns : [B, 77] int32 input_ids (CLS + truncated ids + SEP + PAD)
    """
    B, N = raw_ids.shape

    # --- host glue: truncate, pre-offset by one lane, bake CLS, pad lanes ---
    C = min(N, MAX_LENGTH - 2)                       # at most 75 content cols
    content = raw_ids[:, :C].astype(jnp.int32)
    # lane 0 = CLS_ID, lanes 1..C = content, lanes C+1..127 = PAD_ID.
    ids_padded = jnp.pad(
        content,
        ((0, 0), (1, LANE_W - 1 - C)),
        constant_values=((0, 0), (CLS_ID, PAD_ID)),
    )
    # clamp claimed length to both max content length and provided ids
    content_len = jnp.minimum(lengths.astype(jnp.int32),
                              jnp.int32(min(MAX_LENGTH - 2, N)))
    lengths_2d = content_len.reshape(B, 1)

    # --- batch tiling: 8-aligned row tiles, capped at MAX_ROW_TILE ---
    TB = min(MAX_ROW_TILE, ((B + 7) // 8) * 8)
    Bp = ((B + TB - 1) // TB) * TB
    if Bp != B:
        ids_padded = jnp.pad(ids_padded, ((0, Bp - B), (0, 0)))
        lengths_2d = jnp.pad(lengths_2d, ((0, Bp - B), (0, 0)))

    out = pl.pallas_call(
        _pack_kernel,
        out_shape=jax.ShapeDtypeStruct((Bp, LANE_W), jnp.int32),
        grid=(Bp // TB,),
        in_specs=[
            pl.BlockSpec((TB, 1), lambda i: (i, 0)),
            pl.BlockSpec((TB, LANE_W), lambda i: (i, 0)),
        ],
        out_specs=pl.BlockSpec((TB, LANE_W), lambda i: (i, 0)),
        compiler_params=pltpu.CompilerParams(
            dimension_semantics=("parallel",)),
    )(lengths_2d, ids_padded)

    # glue: drop batch padding, slice back to the module's [B, max_length]
    return out[:B, :MAX_LENGTH]


def _reference(raw_ids, lengths):
    raw_ids = np.asarray(raw_ids)
    lengths = np.asarray(lengths)
    B, N = raw_ids.shape
    out = np.full((B, MAX_LENGTH), PAD_ID, dtype=np.int32)
    for b in range(B):
        L = min(int(lengths[b]), MAX_LENGTH - 2, N)
        out[b, 0] = CLS_ID
        out[b, 1:1 + L] = raw_ids[b, :L]
        out[b, 1 + L] = SEP_ID
    return out


if __name__ == "__main__":
    # TODO(synk): WordPiece string tokenization (text -> subword ids) is
    # host-side string processing with no Pallas equivalent; we feed
    # synthetic pre-tokenized id sequences instead.
    key = jax.random.PRNGKey(0)
    k_ids, k_len = jax.random.split(key)

    B = 8            # batch of "sentences"
    N_RAW = 100      # raw (untruncated) wordpiece ids per sentence

    raw_ids = jax.random.randint(k_ids, (B, N_RAW), 1000, 30522, dtype=jnp.int32)
    # mix of short and long sentences (some exceed max_length -> truncation path)
    lengths = jax.random.randint(k_len, (B,), 3, N_RAW, dtype=jnp.int32)

    tokens = bert_tokenizer_forward(raw_ids, lengths)
    tokens = jax.block_until_ready(tokens)

    expected = _reference(raw_ids, lengths)
    assert tokens.shape == (B, MAX_LENGTH), tokens.shape
    assert tokens.dtype == jnp.int32
    np.testing.assert_array_equal(np.asarray(tokens), expected)

    print("KERNEL_OK")
</pallas_src>

<mosaic_0001>
module attributes {stable_mosaic.version = 11 : i64} {
  func.func @_pack_kernel(%arg0: i32, %arg1: memref<8x1xi32, #tpu.memory_space<vmem>>, %arg2: memref<8x128xi32, #tpu.memory_space<vmem>>, %arg3: memref<8x128xi32, #tpu.memory_space<vmem>>) attributes {dimension_semantics = [#tpu.dimension_semantics<parallel>], iteration_bounds = array<i64: 1>, scalar_prefetch = 0 : i64, scratch_operands = 0 : i64, tpu.core_type = #tpu.core_type<tc>, window_params = [{transform_indices = @transform_0, window_bounds = array<i64: 8, 1>}, {transform_indices = @transform_1, window_bounds = array<i64: 8, 128>}, {transform_indices = @transform_2, window_bounds = array<i64: 8, 128>}]} {
    %0 = tpu.iota {dimensions = array<i32: 1>} : vector<8x128xi32>
    %c0 = arith.constant 0 : index
    %c0_0 = arith.constant 0 : index
    %1 = vector.load %arg1[%c0, %c0_0] : memref<8x1xi32, #tpu.memory_space<vmem>>, vector<8x1xi32>
    %2 = vector.shape_cast %1 : vector<8x1xi32> to vector<8x1xi32>
    %3 = vector.broadcast %2 : vector<8x1xi32> to vector<8x128xi32>
    %4 = arith.cmpi sle, %0, %3 : vector<8x128xi32>
    %c0_1 = arith.constant 0 : index
    %c0_2 = arith.constant 0 : index
    %5 = vector.load %arg2[%c0_1, %c0_2] : memref<8x128xi32, #tpu.memory_space<vmem>>, vector<8x128xi32>
    %c1_i32 = arith.constant 1 : i32
    %6 = vector.broadcast %c1_i32 : i32 to vector<8x128xi32>
    %7 = arith.addi %3, %6 : vector<8x128xi32>
    %8 = arith.cmpi eq, %0, %7 : vector<8x128xi32>
    %c102_i32 = arith.constant 102 : i32
    %c0_i32 = arith.constant 0 : i32
    %9 = vector.broadcast %c102_i32 : i32 to vector<8x128xi32>
    %10 = vector.broadcast %c0_i32 : i32 to vector<8x128xi32>
    %11 = arith.select %8, %9, %10 : vector<8x128xi1>, vector<8x128xi32>
    %12 = arith.select %4, %5, %11 : vector<8x128xi1>, vector<8x128xi32>
    %c0_3 = arith.constant 0 : index
    %c0_4 = arith.constant 0 : index
    %13 = vector.load %arg3[%c0_3, %c0_4] : memref<8x128xi32, #tpu.memory_space<vmem>>, vector<8x128xi32>
    tpu.vector_store %arg3[%c0_3, %c0_4], %12 {strides = array<i32>} : memref<8x128xi32, #tpu.memory_space<vmem>>, vector<8x128xi32>,
    return
  }
  func.func @transform_0(%arg0: i32) -> (i32, i32) {
    %c0_i32 = arith.constant 0 : i32
    %c0_i32_0 = arith.constant 0 : i32
    return %arg0, %c0_i32 : i32, i32
  }
  func.func @transform_1(%arg0: i32) -> (i32, i32) {
    %c0_i32 = arith.constant 0 : i32
    %c0_i32_0 = arith.constant 0 : i32
    return %arg0, %c0_i32 : i32, i32
  }
  func.func @transform_2(%arg0: i32) -> (i32, i32) {
    %c0_i32 = arith.constant 0 : i32
    %c0_i32_0 = arith.constant 0 : i32
    return %arg0, %c0_i32 : i32, i32
  }
}

</mosaic_0001>

<llo_original>
// kernel: tpu_custom_call.1
$region0: #{tpu_custom_call.1}
  #allocation0 [shape = 'u32[]', space=smem, size = 0x4, offset = 0x4, fixed_abs, tag = 'smem constant byte address 0x4 - core index']
  #allocation1 [shape = 'u32[144,128]{1,0:T(1,128)}', space=vmem, size = 0x12000, scoped, tag = 'internal scratch']
  %s0 = inlined_call_operand.vmem [shape: s32[8,1], index: 0, kind: input, shape index: {}]
  %s1 = inlined_call_operand.vmem [shape: s32[8,128], index: 1, kind: input, shape index: {}]
  %s2 = inlined_call_operand.hbm [shape: s32[8,128], index: 2, kind: output, shape index: {}]
  %s3 = sld [smem:[#allocation0]]
  $region18: #{tpu_custom_call.1} parent=0
    _
  %s5 = ssub.s32 1, %s3
  %s6 = scalar_select 0, %s5, %s3
  $region1: #{tpu_custom_call.1} parent=0
    #allocation2 [shape = 'u8[4096]{0}', space=vmem, size = 0x1000, scoped, tag = 'output window, operand 0, single buffered']
    #allocation3 [shape = 's32[1]{0}', space=sflag, size = 0x4, scoped, tag = 'scoped memory for tpu_custom_call.1']
    %7 = vsyncpa [#allocation3], 0
    // Predicated region
    $region2: #{tpu_custom_call.1} parent=1 // pred_check
      _
    $region3: #{tpu_custom_call.1} parent=1 // pred_check_branch
      %9 = sbr.rel (0) target = $region5
    $region4: #{tpu_custom_call.1} parent=1 // pred_region
      _
    $region5: #{tpu_custom_call.1} parent=1 // pred_fallthru
      _
    // Predicated region
    $region6: #{tpu_custom_call.1} parent=1 // pred_check
      _
    $region7: #{tpu_custom_call.1} parent=1 // pred_check_branch
      %11 = sbr.rel (0) target = $region9
    $region8: #{tpu_custom_call.1} parent=1 // pred_region
      _
    $region9: #{tpu_custom_call.1} parent=1 // pred_fallthru
      _
    %v12 = vlaneseq
    %v13 = vand.u32 %v12, 127
    %v14 = vld [vmem:[%s0] sm:$0xff]
    %15 = vset.pattern.permute.xlu0 0
    %16 = vperm.xlu0 %15, %v14
    %v17 = vpop.permute.xlu0 %16
    %vm18 = vcmp.le.s32.totalorder %v13, %v17
    %v19 = vld [vmem:[%s1] sm:$0xff]
    %v20 = vadd.s32 %v17, 1
    %vm21 = vcmp.eq.s32.totalorder %v13, %v20
    %v22 = vsel %vm21, 102, 0
    %v23 = vsel %vm18, %v19, %v22
    %24 = vst [vmem:[#allocation2] sm:$0xff] %v23
    // Predicated region
    $region10: #{tpu_custom_call.1} parent=1 // pred_check
      _
    $region11: #{tpu_custom_call.1} parent=1 // pred_check_branch
      %26 = sbr.rel (0) target = $region13
    $region12: #{tpu_custom_call.1} parent=1 // pred_region
      %s28 = ssub.s32 128, 128
      %29 = vsyncadd [#allocation3], %s28
      %s31 = sshll.u32 [#allocation2], 4
      %s32 = int_to_ptr.vmem [resolvable:$true] %s31
      %34 = dma.vmem_to_hbm [thread:$0]  %s32, 128, %s2, [#allocation3]
    $region13: #{tpu_custom_call.1} parent=1 // pred_fallthru
      _
    // Predicated region
    $region14: #{tpu_custom_call.1} parent=1 // pred_check
      _
    $region15: #{tpu_custom_call.1} parent=1 // pred_check_branch
      %36 = sbr.rel (0) target = $region17
    $region16: #{tpu_custom_call.1} parent=1 // pred_region
      %37 = dma.done [#allocation3], 128
    $region17: #{tpu_custom_call.1} parent=1 // pred_fallthru
      _
    %38 = vsyncpa [#allocation3], 1

</llo_original>
